<compile_context>
chip_gen: v5e
topology: v5e:2x2
jax: 0.10.0
libtpu: 0.0.40
codegen_flags: <defaults>
</compile_context>

<pallas_src>
import jax
import jax.numpy as jnp
from jax.experimental import pallas as pl
from jax.experimental.pallas import tpu as pltpu


N_TRACK = 10
N_WAYPOINTS = 3
D_MODEL = 20
IN_HALF = N_TRACK * 2                  # 20  (features per track side)
IN_FEATURES = 2 * IN_HALF              # 40
OUT_FEATURES = N_WAYPOINTS * 2         # 6

TB_MAX = 8192                          # max batch-tile rows per grid step
MIN_GRID_STEPS = 4                     # keep >= this many steps on large batches
SMALL_BATCH = 2048                     # below this, bypass the kernel entirely
VMEM_LIMIT_BYTES = 48 << 20            # > v5e 16 MiB default, < v7x 64 MiB physical


def _round_up(x, m):
    return ((x + m - 1) // m) * m


def _mlp_kernel(xl_ref, xr_ref, w12l_ref, w12r_ref, b12_ref, w3_ref, b3_ref, out_ref):
    """Fused MLP hot path: (folded proj+linear1 on split inputs) -> ReLU -> linear2."""
    h = (
        jnp.dot(xl_ref[...], w12l_ref[...], preferred_element_type=jnp.float32)
        + jnp.dot(xr_ref[...], w12r_ref[...], preferred_element_type=jnp.float32)
        + b12_ref[...]
    )
    h = jnp.maximum(h, 0.0)                                            # ReLU
    o = jnp.dot(h, w3_ref[...], preferred_element_type=jnp.float32) + b3_ref[...]
    out_ref[...] = o.astype(out_ref.dtype)


def fold_params(params):
    """One-off (parameter-load-time) fold of the first two Linear layers.

    input_projection and linear1 have no nonlinearity between them, so
    W12 = w1 @ w2, b12 = b1 @ w2 + b2.  W12 is split into the left/right track
    halves so the kernel never needs the concatenated (b, 40) src tensor.
    """
    w1, b1, w2, b2, w3, b3 = (
        params["w1"], params["b1"], params["w2"],
        params["b2"], params["w3"], params["b3"],
    )
    return {
        "w12_l": w1[:IN_HALF] @ w2,      # (20, 20)
        "w12_r": w1[IN_HALF:] @ w2,      # (20, 20)
        "b12": b1 @ w2 + b2,             # (1, 20)
        "w3": w3,                        # (20, 6)
        "b3": b3,                        # (1, 6)
    }


def _forward_xla(xl, xr, fp):
    """Plain XLA path (small batches): same folded math, no kernel launch."""
    h = xl @ fp["w12_l"] + xr @ fp["w12_r"] + fp["b12"]
    h = jnp.maximum(h, 0.0)
    return h @ fp["w3"] + fp["b3"]


def transformer_planner_forward(track_left, track_right, folded_params, *,
                                force_pallas=False):
    """Forward pass. `folded_params` comes from fold_params() (precomputed once)."""
    b = track_left.shape[0]

    # Free metadata reshapes (contiguous (b,10,2) -> (b,20)); NO concatenate,
    # NO dtype cast (bf16 inputs are accepted as-is and halve the HBM read).
    xl = track_left.reshape(b, IN_HALF)
    xr = track_right.reshape(b, IN_HALF)
    fp = folded_params

    if b < SMALL_BATCH and not force_pallas:
        out = _forward_xla(xl, xr, fp)
        return out.astype(jnp.float32).reshape(b, N_WAYPOINTS, 2)

    # Sublane packing: 16-bit dtypes pack 2 rows per 32-bit sublane word.
    sub = 16 if jnp.dtype(xl.dtype).itemsize == 2 else 8
    # Biggest tile that still leaves MIN_GRID_STEPS steps for large batches
    # (so v7x's two TensorCores both get work), capped by VMEM budget.
    tb = min(TB_MAX, max(sub, _round_up(pl.cdiv(b, MIN_GRID_STEPS), sub)))
    grid = (pl.cdiv(b, tb),)   # partial last block: OOB reads harmless, writes masked

    in_bytes = b * 2 * IN_HALF * jnp.dtype(xl.dtype).itemsize
    w_bytes = (2 * IN_HALF * D_MODEL + D_MODEL + D_MODEL * OUT_FEATURES + OUT_FEATURES) * 4
    out_bytes = b * OUT_FEATURES * 4
    cost = pl.CostEstimate(
        flops=b * (2 * 2 * IN_HALF * D_MODEL + 2 * D_MODEL * OUT_FEATURES),
        transcendentals=0,
        bytes_accessed=in_bytes + w_bytes + out_bytes,
    )

    out_flat = pl.pallas_call(
        _mlp_kernel,
        out_shape=jax.ShapeDtypeStruct((b, OUT_FEATURES), jnp.float32),
        grid=grid,
        in_specs=[
            # Batch-tiled activations: new block each grid step.
            pl.BlockSpec((tb, IN_HALF), lambda i: (i, 0)),
            pl.BlockSpec((tb, IN_HALF), lambda i: (i, 0)),
            # Weights / biases: constant block index -> loaded once, VMEM-resident.
            pl.BlockSpec((IN_HALF, D_MODEL), lambda i: (0, 0)),
            pl.BlockSpec((IN_HALF, D_MODEL), lambda i: (0, 0)),
            pl.BlockSpec((1, D_MODEL), lambda i: (0, 0)),
            pl.BlockSpec((D_MODEL, OUT_FEATURES), lambda i: (0, 0)),
            pl.BlockSpec((1, OUT_FEATURES), lambda i: (0, 0)),
        ],
        out_specs=pl.BlockSpec((tb, OUT_FEATURES), lambda i: (i, 0)),
        compiler_params=pltpu.CompilerParams(
            # Batch tiles are independent; on megacore chips this lets the grid
            # be sharded across TensorCores.  (CORE_PARALLEL / core_map would be
            # the explicit v7x-only variant; PARALLEL is portable across chips.)
            dimension_semantics=(pltpu.PARALLEL,),
            vmem_limit_bytes=VMEM_LIMIT_BYTES,
        ),
        cost_estimate=cost,
    )(xl, xr, fp["w12_l"], fp["w12_r"], fp["b12"], fp["w3"], fp["b3"])

    return out_flat.reshape(b, N_WAYPOINTS, 2)


def init_params(key):
    """Deterministic init mirroring nn.Linear shapes (stored as (in, out))."""
    ks = jax.random.split(key, 6)

    def linear_init(kw, kb, fan_in, fan_out):
        bound = 1.0 / jnp.sqrt(fan_in)
        w = jax.random.uniform(kw, (fan_in, fan_out), jnp.float32, -bound, bound)
        b = jax.random.uniform(kb, (1, fan_out), jnp.float32, -bound, bound)
        return w, b

    w1, b1 = linear_init(ks[0], ks[1], IN_FEATURES, D_MODEL)
    w2, b2 = linear_init(ks[2], ks[3], D_MODEL, D_MODEL)
    w3, b3 = linear_init(ks[4], ks[5], D_MODEL, OUT_FEATURES)
    return {"w1": w1, "b1": b1, "w2": w2, "b2": b2, "w3": w3, "b3": b3}


def _reference_forward(track_left, track_right, params):
    """Pure-JAX reference matching the original (unfolded) PyTorch forward."""
    b = track_left.shape[0]
    src = jnp.concatenate([track_left, track_right], axis=1).reshape(b, IN_FEATURES)
    h = src @ params["w1"] + params["b1"]
    h = h @ params["w2"] + params["b2"]
    h = jnp.maximum(h, 0.0)
    o = h @ params["w3"] + params["b3"]
    return o.reshape(b, N_WAYPOINTS, 2)


if __name__ == "__main__":
    key = jax.random.PRNGKey(0)
    k_params, k_left, k_right = jax.random.split(key, 3)

    params = init_params(k_params)
    folded = fold_params(params)        # hoisted out of the per-call path

    batch = 2
    track_left = jax.random.normal(k_left, (batch, N_TRACK, 2), jnp.float32)
    track_right = jax.random.normal(k_right, (batch, N_TRACK, 2), jnp.float32)

    # Exercise the Pallas kernel explicitly (small batches normally bypass it).
    out_kernel = transformer_planner_forward(track_left, track_right, folded,
                                             force_pallas=True)
    out_kernel = jax.block_until_ready(out_kernel)

    # Also check the default (small-batch) dispatch path.
    out_dispatch = transformer_planner_forward(track_left, track_right, folded)
    out_dispatch = jax.block_until_ready(out_dispatch)

    ref = _reference_forward(track_left, track_right, params)
    assert out_kernel.shape == (batch, N_WAYPOINTS, 2), out_kernel.shape
    # Weight folding reassociates f32 sums; differences stay well below 1e-5.
    assert jnp.allclose(out_kernel, ref, atol=1e-5, rtol=1e-5), "pallas mismatch vs reference"
    assert jnp.allclose(out_dispatch, ref, atol=1e-5, rtol=1e-5), "xla-path mismatch vs reference"

    print("KERNEL_OK")
</pallas_src>

<mosaic_0001>
module attributes {stable_mosaic.version = 11 : i64} {
  func.func @_mlp_kernel(%arg0: i32, %arg1: memref<8x20xf32, #tpu.memory_space<vmem>>, %arg2: memref<8x20xf32, #tpu.memory_space<vmem>>, %arg3: memref<20x20xf32, #tpu.memory_space<vmem>>, %arg4: memref<20x20xf32, #tpu.memory_space<vmem>>, %arg5: memref<1x20xf32, #tpu.memory_space<vmem>>, %arg6: memref<20x6xf32, #tpu.memory_space<vmem>>, %arg7: memref<1x6xf32, #tpu.memory_space<vmem>>, %arg8: memref<8x6xf32, #tpu.memory_space<vmem>>) attributes {dimension_semantics = [#tpu.dimension_semantics<parallel>], iteration_bounds = array<i64: 1>, scalar_prefetch = 0 : i64, scratch_operands = 0 : i64, tpu.core_type = #tpu.core_type<tc>, window_params = [{transform_indices = @transform_0, window_bounds = array<i64: 8, 20>}, {transform_indices = @transform_1, window_bounds = array<i64: 8, 20>}, {pipeline_mode = #tpu.pipeline_mode<synchronous>, transform_indices = @transform_2, window_bounds = array<i64: 20, 20>}, {pipeline_mode = #tpu.pipeline_mode<synchronous>, transform_indices = @transform_3, window_bounds = array<i64: 20, 20>}, {pipeline_mode = #tpu.pipeline_mode<synchronous>, transform_indices = @transform_4, window_bounds = array<i64: 1, 20>}, {pipeline_mode = #tpu.pipeline_mode<synchronous>, transform_indices = @transform_5, window_bounds = array<i64: 20, 6>}, {pipeline_mode = #tpu.pipeline_mode<synchronous>, transform_indices = @transform_6, window_bounds = array<i64: 1, 6>}, {transform_indices = @transform_7, window_bounds = array<i64: 8, 6>}]} {
    %c0 = arith.constant 0 : index
    %c0_0 = arith.constant 0 : index
    %0 = vector.load %arg1[%c0, %c0_0] : memref<8x20xf32, #tpu.memory_space<vmem>>, vector<8x20xf32>
    %c0_1 = arith.constant 0 : index
    %c0_2 = arith.constant 0 : index
    %1 = vector.load %arg3[%c0_1, %c0_2] : memref<20x20xf32, #tpu.memory_space<vmem>>, vector<20x20xf32>
    %cst = arith.constant dense<0.000000e+00> : vector<8x20xf32>
    %2 = tpu.matmul %0, %1, %cst {dimension_numbers = #tpu.dot_dimension_numbers<[1], [0], [0], [1], [0, 0, 1, 1], [], []>} : vector<8x20xf32>, vector<20x20xf32>, vector<8x20xf32> -> vector<8x20xf32>
    %c0_3 = arith.constant 0 : index
    %c0_4 = arith.constant 0 : index
    %3 = vector.load %arg2[%c0_3, %c0_4] : memref<8x20xf32, #tpu.memory_space<vmem>>, vector<8x20xf32>
    %c0_5 = arith.constant 0 : index
    %c0_6 = arith.constant 0 : index
    %4 = vector.load %arg4[%c0_5, %c0_6] : memref<20x20xf32, #tpu.memory_space<vmem>>, vector<20x20xf32>
    %cst_7 = arith.constant dense<0.000000e+00> : vector<8x20xf32>
    %5 = tpu.matmul %3, %4, %cst_7 {dimension_numbers = #tpu.dot_dimension_numbers<[1], [0], [0], [1], [0, 0, 1, 1], [], []>} : vector<8x20xf32>, vector<20x20xf32>, vector<8x20xf32> -> vector<8x20xf32>
    %6 = arith.addf %2, %5 : vector<8x20xf32>
    %c0_8 = arith.constant 0 : index
    %c0_9 = arith.constant 0 : index
    %7 = vector.load %arg5[%c0_8, %c0_9] : memref<1x20xf32, #tpu.memory_space<vmem>>, vector<1x20xf32>
    %8 = vector.broadcast %7 : vector<1x20xf32> to vector<8x20xf32>
    %9 = arith.addf %6, %8 : vector<8x20xf32>
    %cst_10 = arith.constant 0.000000e+00 : f32
    %10 = vector.broadcast %cst_10 : f32 to vector<8x20xf32>
    %11 = arith.maximumf %9, %10 : vector<8x20xf32>
    %c0_11 = arith.constant 0 : index
    %c0_12 = arith.constant 0 : index
    %12 = vector.load %arg6[%c0_11, %c0_12] : memref<20x6xf32, #tpu.memory_space<vmem>>, vector<20x6xf32>
    %cst_13 = arith.constant dense<0.000000e+00> : vector<8x6xf32>
    %13 = tpu.matmul %11, %12, %cst_13 {dimension_numbers = #tpu.dot_dimension_numbers<[1], [0], [0], [1], [0, 0, 1, 1], [], []>} : vector<8x20xf32>, vector<20x6xf32>, vector<8x6xf32> -> vector<8x6xf32>
    %c0_14 = arith.constant 0 : index
    %c0_15 = arith.constant 0 : index
    %14 = vector.load %arg7[%c0_14, %c0_15] : memref<1x6xf32, #tpu.memory_space<vmem>>, vector<1x6xf32>
    %15 = vector.broadcast %14 : vector<1x6xf32> to vector<8x6xf32>
    %16 = arith.addf %13, %15 : vector<8x6xf32>
    %c0_16 = arith.constant 0 : index
    %c0_17 = arith.constant 0 : index
    %17 = vector.load %arg8[%c0_16, %c0_17] : memref<8x6xf32, #tpu.memory_space<vmem>>, vector<8x6xf32>
    tpu.vector_store %arg8[%c0_16, %c0_17], %16 {strides = array<i32>} : memref<8x6xf32, #tpu.memory_space<vmem>>, vector<8x6xf32>,
    return
  }
  func.func @transform_0(%arg0: i32) -> (i32, i32) {
    %c0_i32 = arith.constant 0 : i32
    %c0_i32_0 = arith.constant 0 : i32
    return %arg0, %c0_i32 : i32, i32
  }
  func.func @transform_1(%arg0: i32) -> (i32, i32) {
    %c0_i32 = arith.constant 0 : i32
    %c0_i32_0 = arith.constant 0 : i32
    return %arg0, %c0_i32 : i32, i32
  }
  func.func @transform_2(%arg0: i32) -> (i32, i32) {
    %c0_i32 = arith.constant 0 : i32
    %c0_i32_0 = arith.constant 0 : i32
    %c0_i32_1 = arith.constant 0 : i32
    return %c0_i32, %c0_i32_0 : i32, i32
  }
  func.func @transform_3(%arg0: i32) -> (i32, i32) {
    %c0_i32 = arith.constant 0 : i32
    %c0_i32_0 = arith.constant 0 : i32
    %c0_i32_1 = arith.constant 0 : i32
    return %c0_i32, %c0_i32_0 : i32, i32
  }
  func.func @transform_4(%arg0: i32) -> (i32, i32) {
    %c0_i32 = arith.constant 0 : i32
    %c0_i32_0 = arith.constant 0 : i32
    %c0_i32_1 = arith.constant 0 : i32
    return %c0_i32, %c0_i32_0 : i32, i32
  }
  func.func @transform_5(%arg0: i32) -> (i32, i32) {
    %c0_i32 = arith.constant 0 : i32
    %c0_i32_0 = arith.constant 0 : i32
    %c0_i32_1 = arith.constant 0 : i32
    return %c0_i32, %c0_i32_0 : i32, i32
  }
  func.func @transform_6(%arg0: i32) -> (i32, i32) {
    %c0_i32 = arith.constant 0 : i32
    %c0_i32_0 = arith.constant 0 : i32
    %c0_i32_1 = arith.constant 0 : i32
    return %c0_i32, %c0_i32_0 : i32, i32
  }
  func.func @transform_7(%arg0: i32) -> (i32, i32) {
    %c0_i32 = arith.constant 0 : i32
    %c0_i32_0 = arith.constant 0 : i32
    return %arg0, %c0_i32 : i32, i32
  }
}

</mosaic_0001>

<llo_original>
// kernel: tpu_custom_call.1
$region0: #{tpu_custom_call.1}
  #allocation0 [shape = 'u32[]', space=smem, size = 0x4, offset = 0x4, fixed_abs, tag = 'smem constant byte address 0x4 - core index']
  #allocation1 [shape = 'u32[72,128]{1,0:T(1,128)}', space=vmem, size = 0x9000, scoped, tag = 'internal scratch']
  %s0 = inlined_call_operand.vmem [shape: f32[2,20], index: 0, kind: input, shape index: {}]
  %s1 = inlined_call_operand.vmem [shape: f32[2,20], index: 1, kind: input, shape index: {}]
  %s2 = inlined_call_operand.vmem [shape: f32[20,20], index: 2, kind: input, shape index: {}]
  %s3 = inlined_call_operand.hbm [shape: f32[20,20], index: 3, kind: input, shape index: {}]
  %s4 = inlined_call_operand.vmem [shape: f32[1,20], index: 4, kind: input, shape index: {}]
  %s5 = inlined_call_operand.vmem [shape: f32[20,6], index: 5, kind: input, shape index: {}]
  %s6 = inlined_call_operand.vmem [shape: f32[1,6], index: 6, kind: input, shape index: {}]
  %s7 = inlined_call_operand.hbm [shape: f32[2,6], index: 7, kind: output, shape index: {}]
  %s8 = sld [smem:[#allocation0]]
  $region42: #{tpu_custom_call.1} parent=0
    _
  %s10 = ssub.s32 1, %s8
  %s11 = scalar_select 0, %s10, %s8
  $region1: #{tpu_custom_call.1} parent=0
    #allocation2 [shape = 'u8[12288]{0}', space=vmem, size = 0x3000, scoped, tag = 'input window, operand 3, single buffered']
    #allocation3 [shape = 's32[1]{0}', space=sflag, size = 0x4, scoped, tag = 'scoped memory for tpu_custom_call.1']
    #allocation4 [shape = 's32[1]{0}', space=sflag, size = 0x4, scoped, tag = 'scoped memory for tpu_custom_call.1']
    #allocation5 [shape = 'u8[4096]{0}', space=vmem, size = 0x1000, scoped, tag = 'output window, operand 0, single buffered']
    %12 = vsyncpa [#allocation3], 0
    %13 = vsyncpa [#allocation4], 0
    // Predicated region
    $region2: #{tpu_custom_call.1} parent=1 // pred_check
      _
    $region3: #{tpu_custom_call.1} parent=1 // pred_check_branch
      %15 = sbr.rel (0) target = $region5
    $region4: #{tpu_custom_call.1} parent=1 // pred_region
      _
    $region5: #{tpu_custom_call.1} parent=1 // pred_fallthru
      _
    // Predicated region
    $region6: #{tpu_custom_call.1} parent=1 // pred_check
      _
    $region7: #{tpu_custom_call.1} parent=1 // pred_check_branch
      %17 = sbr.rel (0) target = $region9
    $region8: #{tpu_custom_call.1} parent=1 // pred_region
      _
    $region9: #{tpu_custom_call.1} parent=1 // pred_fallthru
      _
    // Predicated region
    $region10: #{tpu_custom_call.1} parent=1 // pred_check
      _
    $region11: #{tpu_custom_call.1} parent=1 // pred_check_branch
      %19 = sbr.rel (0) target = $region13
    $region12: #{tpu_custom_call.1} parent=1 // pred_region
      _
    $region13: #{tpu_custom_call.1} parent=1 // pred_fallthru
      _
    // Predicated region
    $region14: #{tpu_custom_call.1} parent=1 // pred_check
      _
    $region15: #{tpu_custom_call.1} parent=1 // pred_check_branch
      %21 = sbr.rel (0) target = $region17
    $region16: #{tpu_custom_call.1} parent=1 // pred_region
      %23 = vsyncadd [#allocation3], 0
      %s24 = sshll.u32 %s3, 4
      %s25 = int_to_ptr.hbm [resolvable:$true] %s24
      %s26 = sshll.u32 [#allocation2], 4
      %s27 = int_to_ptr.vmem [resolvable:$true] %s26
      %32 = dma.hbm_to_vmem [thread:$0]  %s25, 384, %s27, [#allocation3], 128, 128, 8
    $region17: #{tpu_custom_call.1} parent=1 // pred_fallthru
      _
    // Predicated region
    $region18: #{tpu_custom_call.1} parent=1 // pred_check
      _
    $region19: #{tpu_custom_call.1} parent=1 // pred_check_branch
      %34 = sbr.rel (0) target = $region21
    $region20: #{tpu_custom_call.1} parent=1 // pred_region
      _
    $region21: #{tpu_custom_call.1} parent=1 // pred_fallthru
      _
    // Predicated region
    $region22: #{tpu_custom_call.1} parent=1 // pred_check
      _
    $region23: #{tpu_custom_call.1} parent=1 // pred_check_branch
      %36 = sbr.rel (0) target = $region25
    $region24: #{tpu_custom_call.1} parent=1 // pred_region
      _
    $region25: #{tpu_custom_call.1} parent=1 // pred_fallthru
      _
    // Predicated region
    $region26: #{tpu_custom_call.1} parent=1 // pred_check
      _
    $region27: #{tpu_custom_call.1} parent=1 // pred_check_branch
      %38 = sbr.rel (0) target = $region29
    $region28: #{tpu_custom_call.1} parent=1 // pred_region
      _
    $region29: #{tpu_custom_call.1} parent=1 // pred_fallthru
      _
    // Predicated region
    $region30: #{tpu_custom_call.1} parent=1 // pred_check
      _
    $region31: #{tpu_custom_call.1} parent=1 // pred_check_branch
      %40 = sbr.rel (0) target = $region33
    $region32: #{tpu_custom_call.1} parent=1 // pred_region
      %42 = dma.done [#allocation3], 384
    $region33: #{tpu_custom_call.1} parent=1 // pred_fallthru
      _
    %v43 = vld [vmem:[%s0] sm:$0xff]
    %v44 = vld [vmem:[%s2] sm:$0xff]
    %v45 = vld [vmem:[%s2 + $0x8] sm:$0xff]
    %v46 = vld [vmem:[%s2 + $0x10] sm:$0xf]
    %v47 = vld [vmem:[%s1] sm:$0xff]
    %v48 = vld [vmem:[#allocation2] sm:$0xff]
    %v49 = vld [vmem:[#allocation2 + $0x8] sm:$0xff]
    %v50 = vld [vmem:[#allocation2 + $0x10] sm:$0xf]
    %vm51 = vcmask 162816
    %v53 = vsel %vm51, %v47, 0
    %vm55 = vcmask 1043456
    %v57 = vsel %vm55, %v50, 0
    %59 = vmatpush.msra.mxu0 0.0
    %60 = vmatpush.msra.mxu0 0.0
    %61 = vmatpush.msra.mxu0 0.0
    %62 = vmatpush.msra.mxu0 0.0
    %63 = vmatpush.msra.mxu0 0.0
    %64 = vmatpush.msra.mxu0 0.0
    %65 = vmatpush.msra.mxu0 0.0
    %66 = vmatpush.msra.mxu0 0.0
    %67 = vmatpush.msra.mxu0 0.0
    %68 = vmatpush.msra.mxu0 0.0
    %69 = vmatpush.msra.mxu0 0.0
    %70 = vmatpush.msra.mxu0 0.0
    %71 = vmatpush.msra.mxu0 0.0
    %72 = vmatpush.msra.mxu0 %v57
    %73 = vmatpush.msra.mxu0 %v49
    %74 = vmatpush.msra.mxu0 %v48
    %75 = vmatmul.f32.gmra.mxu0 %v53
    %v76 = vpop.f32.mrf.mxu0
    %v77 = vadd.f32 0.0, %v76
    %78 = vdwg.mxu0
    %v80 = vsel %vm51, %v43, 0
    %v83 = vsel %vm55, %v46, 0
    %85 = vmatpush.msra.mxu0 0.0
    %86 = vmatpush.msra.mxu0 0.0
    %87 = vmatpush.msra.mxu0 0.0
    %88 = vmatpush.msra.mxu0 0.0
    %89 = vmatpush.msra.mxu0 0.0
    %90 = vmatpush.msra.mxu0 0.0
    %91 = vmatpush.msra.mxu0 0.0
    %92 = vmatpush.msra.mxu0 0.0
    %93 = vmatpush.msra.mxu0 0.0
    %94 = vmatpush.msra.mxu0 0.0
    %95 = vmatpush.msra.mxu0 0.0
    %96 = vmatpush.msra.mxu0 0.0
    %97 = vmatpush.msra.mxu0 0.0
    %98 = vmatpush.msra.mxu0 %v83
    %99 = vmatpush.msra.mxu0 %v45
    %100 = vmatpush.msra.mxu0 %v44
    %101 = vmatmul.f32.gmra.mxu0 %v80
    %v102 = vpop.f32.mrf.mxu0
    %v103 = vadd.f32 %v77, %v102
    %104 = vdwg.mxu0
    %v105 = vld [vmem:[%s4] sm:$0x1]
    %v107 = vperm.slane %v105, 0
    %v109 = vadd.f32 %v103, %v107
    %v110 = vmax.f32 %v109, 0.0
    %v111 = vld [vmem:[%s5] sm:$0xff]
    %v112 = vld [vmem:[%s5 + $0x8] sm:$0xff]
    %v113 = vld [vmem:[%s5 + $0x10] sm:$0xf]
    %v114 = vld [vmem:[%s6] sm:$0x1]
    %v116 = vperm.slane %v114, 0
    %v119 = vsel %vm51, %v110, 0
    %v122 = vsel %vm55, %v113, 0
    %124 = vmatpush.msra.mxu0 0.0
    %125 = vmatpush.msra.mxu0 0.0
    %126 = vmatpush.msra.mxu0 0.0
    %127 = vmatpush.msra.mxu0 0.0
    %128 = vmatpush.msra.mxu0 0.0
    %129 = vmatpush.msra.mxu0 0.0
    %130 = vmatpush.msra.mxu0 0.0
    %131 = vmatpush.msra.mxu0 0.0
    %132 = vmatpush.msra.mxu0 0.0
    %133 = vmatpush.msra.mxu0 0.0
    %134 = vmatpush.msra.mxu0 0.0
    %135 = vmatpush.msra.mxu0 0.0
    %136 = vmatpush.msra.mxu0 0.0
    %137 = vmatpush.msra.mxu0 %v122
    %138 = vmatpush.msra.mxu0 %v112
    %139 = vmatpush.msra.mxu0 %v111
    %140 = vmatmul.f32.gmra.mxu0 %v119
    %v141 = vpop.f32.mrf.mxu0
    %v142 = vadd.f32 %v116, %v141
    %143 = vdwg.mxu0
    %vm144 = vcmask 48128
    %145 = vst.msk [vmem:[#allocation5] sm:$0xff] %vm144, %v142
    // Predicated region
    $region34: #{tpu_custom_call.1} parent=1 // pred_check
      _
    $region35: #{tpu_custom_call.1} parent=1 // pred_check_branch
      %147 = sbr.rel (0) target = $region37
    $region36: #{tpu_custom_call.1} parent=1 // pred_region
      %149 = vsyncadd [#allocation4], 96
      %s150 = sshll.u32 [#allocation5], 4
      %s151 = int_to_ptr.vmem [resolvable:$true] %s150
      %s152 = sshll.u32 %s7, 4
      %s153 = int_to_ptr.hbm [resolvable:$true] %s152
      %158 = dma.vmem_to_hbm [thread:$0]  %s151, 32, %s153, [#allocation4], 32, 32, 2
    $region37: #{tpu_custom_call.1} parent=1 // pred_fallthru
      _
    // Predicated region
    $region38: #{tpu_custom_call.1} parent=1 // pred_check
      _
    $region39: #{tpu_custom_call.1} parent=1 // pred_check_branch
      %160 = sbr.rel (0) target = $region41
    $region40: #{tpu_custom_call.1} parent=1 // pred_region
      %162 = dma.done [#allocation4], 128
    $region41: #{tpu_custom_call.1} parent=1 // pred_fallthru
      _
    %163 = vsyncpa [#allocation3], 1
    %164 = vsyncpa [#allocation4], 1

</llo_original>
